<compile_context>
chip_gen: v6e
topology: v6e:2x2x1
jax: 0.10.0
libtpu: 0.0.40
codegen_flags: <defaults>
</compile_context>

<pallas_src>
import functools

import numpy as np

import jax
import jax.numpy as jnp
from jax import lax
from jax.experimental import pallas as pl
from jax.experimental.pallas import tpu as pltpu


def _a3_kernel(x_ref, tn_g_ref, tn_b_ref, w_tl1_ref, w_tl2_ref, w_feat_ref,
               n_g_ref, n_b_ref, a3_ref, att_ref, *, eps: float):
    """One grid step == one block of Bblk batch samples. x_ref: (Bblk, S, H)."""
    Bblk, S, H = x_ref.shape
    T = w_tl2_ref.shape[0]
    cdt = w_tl1_ref.dtype                        # MXU operand dtype (bf16)

    # ---- token_norm: LayerNorm over H on the flattened (Bblk*S, H) slab ------
    x = x_ref[...].reshape(Bblk * S, H).astype(jnp.float32)
    g1 = tn_g_ref[...]                           # (1, H) f32
    b1 = tn_b_ref[...]
    mu = jnp.mean(x, axis=-1, keepdims=True)
    xc = x - mu
    var = jnp.mean(xc * xc, axis=-1, keepdims=True)
    xn = xc * lax.rsqrt(var + eps) * g1 + b1     # (Bblk*S, H) f32
    xn_c = xn.astype(cdt)                        # single cast feeds both matmuls

    # ---- grouped 1x1 convs as block-diagonal matmuls (bf16 in, f32 accum) ----
    y1 = lax.dot_general(xn_c, w_tl1_ref[...], (((1,), (1,)), ((), ())),
                         preferred_element_type=jnp.float32)       # (Bblk*S, H)
    feat = lax.dot_general(xn_c, w_feat_ref[...], (((1,), (1,)), ((), ())),
                           preferred_element_type=jnp.float32)     # (Bblk*S, H)
    y1_c = y1.astype(cdt)
    feat_c = feat.astype(cdt)
    w_tl2 = w_tl2_ref[...]                       # (T, H) bf16
    g2 = n_g_ref[...]                            # (1, H) f32
    b2 = n_b_ref[...]

    # ---- per-sample: selection -> softmax over S -> att @ feat -> LayerNorm --
    for b in range(Bblk):                        # Bblk is small & static
        lo = b * S
        y1_b = y1_c[lo:lo + S, :]                # (S, H)
        feat_b = feat_c[lo:lo + S, :]            # (S, H)

        # "selected" produced directly in (T, S) layout (contract over H) so the
        # softmax reduction runs over the lane axis; avoids an XLU transpose.
        sel_t = lax.dot_general(w_tl2, y1_b, (((1,), (1,)), ((), ())),
                                preferred_element_type=jnp.float32)    # (T, S)
        m = jnp.max(sel_t, axis=-1, keepdims=True)
        e = jnp.exp(sel_t - m)
        denom = jnp.sum(e, axis=-1, keepdims=True)
        att = e * pl.reciprocal(denom, approx=True)                    # (T, S)

        out = jnp.dot(att.astype(cdt), feat_b,
                      preferred_element_type=jnp.float32)              # (T, H)

        mu2 = jnp.mean(out, axis=-1, keepdims=True)
        oc = out - mu2
        var2 = jnp.mean(oc * oc, axis=-1, keepdims=True)
        a3 = oc * lax.rsqrt(var2 + eps) * g2 + b2                      # (T, H)

        a3_ref[b] = a3.astype(a3_ref.dtype)
        att_ref[b] = att.astype(att_ref.dtype)


def _grouped_to_block_diag(w_grouped: jax.Array, groups: int) -> jax.Array:
    """Grouped 1x1-conv weight (out_ch, in_ch//groups) -> dense block-diag (out_ch, in_ch)."""
    out_ch, in_pg = w_grouped.shape
    out_pg = out_ch // groups
    blocks = w_grouped.reshape(groups, out_pg, in_pg)          # (G, out_pg, in_pg)
    eye_g = jnp.eye(groups, dtype=w_grouped.dtype)             # (G, G)
    w_full = jnp.einsum("gij,gh->gihj", blocks, eye_g)
    return w_full.reshape(out_ch, groups * in_pg)


def _pick_block_b(batch: int, max_block: int = 8) -> int:
    """Largest divisor of `batch` <= max_block, preferring grid length >= 2 (v7x: 2 TCs)."""
    divs = [d for d in range(1, min(batch, max_block) + 1) if batch % d == 0]
    two_plus = [d for d in divs if batch // d >= 2]
    return max(two_plus) if two_plus else max(divs)


def _vmem_limit_bytes(bblk, S, H, T, io_isz, w_isz) -> int:
    """Explicit VMEM budget: weights + double-buffered I/O blocks + f32 intermediates."""
    weights = (2 * H * H + T * H) * w_isz + 4 * H * 4          # conv weights + LN vectors
    io_block = bblk * (S * H + T * H + T * S) * io_isz         # x + a3 + att blocks
    interm = bblk * S * H * 4 * 3                              # xn, y1, feat in f32
    est = 2 * weights + 2 * io_block + 2 * interm              # double-buffering + slack
    return int(min(max(est, 8 << 20), 64 << 20))               # 64 MiB = v7x physical cap


def mgpstr_a3_forward(hidden_states: jax.Array, params: dict, *,
                      groups: int = 8, eps: float = 1e-5,
                      block_b: int | None = None,
                      compute_dtype=jnp.bfloat16):
    """JAX/Pallas equivalent of MgpstrA3Module.forward. Returns (a3_out, attentions)."""
    B, S, H = hidden_states.shape
    w_tl2 = params["tokenlearner_conv2_weight"]                # (T, H)
    T = w_tl2.shape[0]

    if block_b is None:
        block_b = _pick_block_b(B)
    assert B % block_b == 0, (B, block_b)
    grid_b = B // block_b

    # Grouped 1x1 convs expressed as block-diagonal channel-mixing matrices,
    # built once in the wrapper and pre-cast to the MXU operand dtype (bf16).
    w_tl1_bd = _grouped_to_block_diag(
        params["tokenlearner_conv1_weight"], groups).astype(compute_dtype)
    w_feat_bd = _grouped_to_block_diag(
        params["feat_conv_weight"], groups).astype(compute_dtype)
    w_tl2_c = w_tl2.astype(compute_dtype)

    # LayerNorm affine params stay in f32 (statistics are computed in f32).
    g1 = params["token_norm_weight"].reshape(1, H).astype(jnp.float32)
    b1 = params["token_norm_bias"].reshape(1, H).astype(jnp.float32)
    g2 = params["norm_weight"].reshape(1, H).astype(jnp.float32)
    b2 = params["norm_bias"].reshape(1, H).astype(jnp.float32)

    io_isz = jnp.dtype(hidden_states.dtype).itemsize
    w_isz = jnp.dtype(compute_dtype).itemsize

    cost = pl.CostEstimate(
        flops=2 * B * (2 * S * H * H + S * H * T + T * S * H),
        transcendentals=B * T * S,
        bytes_accessed=B * (S * H + T * H + T * S) * io_isz
                       + (2 * H * H + T * H) * w_isz + 4 * H * 4,
    )

    kernel = functools.partial(_a3_kernel, eps=float(eps))

    a3_out, attentions = pl.pallas_call(
        kernel,
        out_shape=(
            jax.ShapeDtypeStruct((B, T, H), hidden_states.dtype),
            jax.ShapeDtypeStruct((B, T, S), hidden_states.dtype),
        ),
        grid=(grid_b,),
        in_specs=[
            pl.BlockSpec((block_b, S, H), lambda i: (i, 0, 0)),   # hidden_states block
            pl.BlockSpec((1, H), lambda i: (0, 0)),               # token_norm gamma
            pl.BlockSpec((1, H), lambda i: (0, 0)),               # token_norm beta
            # Constant index_map -> fetched once, VMEM-resident for the whole grid.
            # (pl.Buffered(1) would reclaim the second weight buffer; left at the
            #  default for lowering robustness.)
            pl.BlockSpec((H, H), lambda i: (0, 0)),               # tokenLearner conv1 (block-diag, bf16)
            pl.BlockSpec((T, H), lambda i: (0, 0)),               # tokenLearner conv2 (bf16)
            pl.BlockSpec((H, H), lambda i: (0, 0)),               # feat conv (block-diag, bf16)
            pl.BlockSpec((1, H), lambda i: (0, 0)),               # norm gamma
            pl.BlockSpec((1, H), lambda i: (0, 0)),               # norm beta
        ],
        out_specs=(
            pl.BlockSpec((block_b, T, H), lambda i: (i, 0, 0)),   # a3_out
            pl.BlockSpec((block_b, T, S), lambda i: (i, 0, 0)),   # attentions
        ),
        compiler_params=pltpu.CompilerParams(
            dimension_semantics=("parallel",),                    # independent batch blocks
            vmem_limit_bytes=_vmem_limit_bytes(block_b, S, H, T, io_isz, w_isz),
        ),
        cost_estimate=cost,
    )(hidden_states, g1, b1, w_tl1_bd, w_tl2_c, w_feat_bd, g2, b2)

    return a3_out, attentions


if __name__ == "__main__":
    # Small shapes consistent with the module:
    #   B=2 batch, S=8 sequence (patches), H=32 hidden (divisible by groups=8),
    #   T=27 max_token_length (MGP-STR default).
    B, S, H, T, G = 2, 8, 32, 27, 8
    eps = 1e-5

    key = jax.random.PRNGKey(0)
    ks = jax.random.split(key, 8)

    x = jax.random.normal(ks[0], (B, S, H), dtype=jnp.float32)
    params = {
        "token_norm_weight": 1.0 + 0.1 * jax.random.normal(ks[1], (H,), dtype=jnp.float32),
        "token_norm_bias": 0.1 * jax.random.normal(ks[2], (H,), dtype=jnp.float32),
        # conv weights: (out_ch, in_ch_per_group) for grouped 1x1, (out_ch, in_ch) for dense
        "tokenlearner_conv1_weight": jax.random.normal(ks[3], (H, H // G), dtype=jnp.float32)
        / jnp.sqrt(jnp.float32(H // G)),
        "tokenlearner_conv2_weight": jax.random.normal(ks[4], (T, H), dtype=jnp.float32)
        / jnp.sqrt(jnp.float32(H)),
        "feat_conv_weight": jax.random.normal(ks[5], (H, H // G), dtype=jnp.float32)
        / jnp.sqrt(jnp.float32(H // G)),
        "norm_weight": 1.0 + 0.1 * jax.random.normal(ks[6], (H,), dtype=jnp.float32),
        "norm_bias": 0.1 * jax.random.normal(ks[7], (H,), dtype=jnp.float32),
    }

    a3_out, attn = mgpstr_a3_forward(x, params, groups=G, eps=eps)
    a3_out, attn = jax.block_until_ready((a3_out, attn))

    # ---- Pure-JAX reference with matched (bf16-operand) matmul precision -----
    def ref_forward(x, p, cdt=jnp.bfloat16):
        g1, b1 = p["token_norm_weight"], p["token_norm_bias"]
        mu = x.mean(-1, keepdims=True)
        var = ((x - mu) ** 2).mean(-1, keepdims=True)
        xn = (x - mu) / jnp.sqrt(var + eps) * g1 + b1
        w1 = _grouped_to_block_diag(p["tokenlearner_conv1_weight"], G).astype(cdt)
        wf = _grouped_to_block_diag(p["feat_conv_weight"], G).astype(cdt)
        w2 = p["tokenlearner_conv2_weight"].astype(cdt)
        xn_c = xn.astype(cdt)
        y1 = jnp.einsum("bsh,oh->bso", xn_c, w1, preferred_element_type=jnp.float32)
        sel = jnp.einsum("bsh,th->bts", y1.astype(cdt), w2,
                         preferred_element_type=jnp.float32)           # (B, T, S)
        att = jax.nn.softmax(sel, axis=-1)
        feat = jnp.einsum("bsh,oh->bso", xn_c, wf, preferred_element_type=jnp.float32)
        out = jnp.einsum("bts,bsh->bth", att.astype(cdt), feat.astype(cdt),
                         preferred_element_type=jnp.float32)
        mu2 = out.mean(-1, keepdims=True)
        var2 = ((out - mu2) ** 2).mean(-1, keepdims=True)
        a3 = (out - mu2) / jnp.sqrt(var2 + eps) * p["norm_weight"] + p["norm_bias"]
        return a3, att

    a3_ref, att_ref = jax.block_until_ready(ref_forward(x, params))

    assert a3_out.shape == (B, T, H), a3_out.shape
    assert attn.shape == (B, T, S), attn.shape

    attn_np = np.asarray(attn, dtype=np.float32)
    a3_np = np.asarray(a3_out, dtype=np.float32)
    # Softmax rows must sum to ~1 (approx-reciprocal tolerance).
    assert np.allclose(attn_np.sum(-1), 1.0, atol=5e-3), float(np.max(np.abs(attn_np.sum(-1) - 1.0)))

    err_att = float(np.max(np.abs(attn_np - np.asarray(att_ref, dtype=np.float32))))
    err_a3 = float(np.max(np.abs(a3_np - np.asarray(a3_ref, dtype=np.float32))))
    assert np.allclose(attn_np, np.asarray(att_ref, dtype=np.float32),
                       rtol=2e-2, atol=2e-2), err_att
    assert np.allclose(a3_np, np.asarray(a3_ref, dtype=np.float32),
                       rtol=2e-2, atol=2e-2), err_a3

    print("KERNEL_OK")
</pallas_src>

<mosaic_0001>
module attributes {stable_mosaic.version = 11 : i64} {
  func.func @_a3_kernel(%arg0: i32, %arg1: memref<1x8x32xf32, #tpu.memory_space<vmem>>, %arg2: memref<1x32xf32, #tpu.memory_space<vmem>>, %arg3: memref<1x32xf32, #tpu.memory_space<vmem>>, %arg4: memref<32x32xbf16, #tpu.memory_space<vmem>>, %arg5: memref<27x32xbf16, #tpu.memory_space<vmem>>, %arg6: memref<32x32xbf16, #tpu.memory_space<vmem>>, %arg7: memref<1x32xf32, #tpu.memory_space<vmem>>, %arg8: memref<1x32xf32, #tpu.memory_space<vmem>>, %arg9: memref<1x27x32xf32, #tpu.memory_space<vmem>>, %arg10: memref<1x27x8xf32, #tpu.memory_space<vmem>>) attributes {dimension_semantics = [#tpu.dimension_semantics<parallel>], iteration_bounds = array<i64: 2>, scalar_prefetch = 0 : i64, scratch_operands = 0 : i64, tpu.core_type = #tpu.core_type<tc>, window_params = [{transform_indices = @transform_0, window_bounds = array<i64: 1, 8, 32>}, {pipeline_mode = #tpu.pipeline_mode<synchronous>, transform_indices = @transform_1, window_bounds = array<i64: 1, 32>}, {pipeline_mode = #tpu.pipeline_mode<synchronous>, transform_indices = @transform_2, window_bounds = array<i64: 1, 32>}, {pipeline_mode = #tpu.pipeline_mode<synchronous>, transform_indices = @transform_3, window_bounds = array<i64: 32, 32>}, {pipeline_mode = #tpu.pipeline_mode<synchronous>, transform_indices = @transform_4, window_bounds = array<i64: 27, 32>}, {pipeline_mode = #tpu.pipeline_mode<synchronous>, transform_indices = @transform_5, window_bounds = array<i64: 32, 32>}, {pipeline_mode = #tpu.pipeline_mode<synchronous>, transform_indices = @transform_6, window_bounds = array<i64: 1, 32>}, {pipeline_mode = #tpu.pipeline_mode<synchronous>, transform_indices = @transform_7, window_bounds = array<i64: 1, 32>}, {transform_indices = @transform_8, window_bounds = array<i64: 1, 27, 32>}, {transform_indices = @transform_9, window_bounds = array<i64: 1, 27, 8>}]} {
    %c0 = arith.constant 0 : index
    %c0_0 = arith.constant 0 : index
    %c0_1 = arith.constant 0 : index
    %0 = vector.load %arg1[%c0, %c0_0, %c0_1] : memref<1x8x32xf32, #tpu.memory_space<vmem>>, vector<1x8x32xf32>
    %1 = vector.shape_cast %0 : vector<1x8x32xf32> to vector<8x32xf32>
    %c0_2 = arith.constant 0 : index
    %c0_3 = arith.constant 0 : index
    %2 = vector.load %arg2[%c0_2, %c0_3] : memref<1x32xf32, #tpu.memory_space<vmem>>, vector<1x32xf32>
    %c0_4 = arith.constant 0 : index
    %c0_5 = arith.constant 0 : index
    %3 = vector.load %arg3[%c0_4, %c0_5] : memref<1x32xf32, #tpu.memory_space<vmem>>, vector<1x32xf32>
    %cst = arith.constant dense<0.000000e+00> : vector<8xf32>
    %4 = vector.multi_reduction <add>, %1, %cst [1] : vector<8x32xf32> to vector<8xf32>
    %5 = vector.shape_cast %4 : vector<8xf32> to vector<8x1xf32>
    %cst_6 = arith.constant 3.200000e+01 : f32
    %6 = vector.broadcast %cst_6 : f32 to vector<8x1xf32>
    %7 = arith.divf %5, %6 : vector<8x1xf32>
    %8 = vector.broadcast %7 : vector<8x1xf32> to vector<8x32xf32>
    %9 = arith.subf %1, %8 : vector<8x32xf32>
    %10 = arith.mulf %9, %9 : vector<8x32xf32>
    %cst_7 = arith.constant dense<0.000000e+00> : vector<8xf32>
    %11 = vector.multi_reduction <add>, %10, %cst_7 [1] : vector<8x32xf32> to vector<8xf32>
    %12 = vector.shape_cast %11 : vector<8xf32> to vector<8x1xf32>
    %cst_8 = arith.constant 3.200000e+01 : f32
    %13 = vector.broadcast %cst_8 : f32 to vector<8x1xf32>
    %14 = arith.divf %12, %13 : vector<8x1xf32>
    %cst_9 = arith.constant 9.99999974E-6 : f32
    %15 = vector.broadcast %cst_9 : f32 to vector<8x1xf32>
    %16 = arith.addf %14, %15 : vector<8x1xf32>
    %17 = math.rsqrt %16 : vector<8x1xf32>
    %18 = vector.broadcast %17 : vector<8x1xf32> to vector<8x32xf32>
    %19 = arith.mulf %9, %18 : vector<8x32xf32>
    %20 = vector.broadcast %2 : vector<1x32xf32> to vector<8x32xf32>
    %21 = arith.mulf %19, %20 : vector<8x32xf32>
    %22 = vector.broadcast %3 : vector<1x32xf32> to vector<8x32xf32>
    %23 = arith.addf %21, %22 : vector<8x32xf32>
    %24 = arith.truncf %23 : vector<8x32xf32> to vector<8x32xbf16>
    %c0_10 = arith.constant 0 : index
    %c0_11 = arith.constant 0 : index
    %25 = vector.load %arg4[%c0_10, %c0_11] : memref<32x32xbf16, #tpu.memory_space<vmem>>, vector<32x32xbf16>
    %cst_12 = arith.constant dense<0.000000e+00> : vector<8x32xf32>
    %26 = tpu.matmul %24, %25, %cst_12 {dimension_numbers = #tpu.dot_dimension_numbers<[1], [1], [0], [0], [0, 0, 1, 0], [], []>} : vector<8x32xbf16>, vector<32x32xbf16>, vector<8x32xf32> -> vector<8x32xf32>
    %c0_13 = arith.constant 0 : index
    %c0_14 = arith.constant 0 : index
    %27 = vector.load %arg6[%c0_13, %c0_14] : memref<32x32xbf16, #tpu.memory_space<vmem>>, vector<32x32xbf16>
    %cst_15 = arith.constant dense<0.000000e+00> : vector<8x32xf32>
    %28 = tpu.matmul %24, %27, %cst_15 {dimension_numbers = #tpu.dot_dimension_numbers<[1], [1], [0], [0], [0, 0, 1, 0], [], []>} : vector<8x32xbf16>, vector<32x32xbf16>, vector<8x32xf32> -> vector<8x32xf32>
    %29 = arith.truncf %26 : vector<8x32xf32> to vector<8x32xbf16>
    %30 = arith.truncf %28 : vector<8x32xf32> to vector<8x32xbf16>
    %c0_16 = arith.constant 0 : index
    %c0_17 = arith.constant 0 : index
    %31 = vector.load %arg5[%c0_16, %c0_17] : memref<27x32xbf16, #tpu.memory_space<vmem>>, vector<27x32xbf16>
    %c0_18 = arith.constant 0 : index
    %c0_19 = arith.constant 0 : index
    %32 = vector.load %arg7[%c0_18, %c0_19] : memref<1x32xf32, #tpu.memory_space<vmem>>, vector<1x32xf32>
    %c0_20 = arith.constant 0 : index
    %c0_21 = arith.constant 0 : index
    %33 = vector.load %arg8[%c0_20, %c0_21] : memref<1x32xf32, #tpu.memory_space<vmem>>, vector<1x32xf32>
    %cst_22 = arith.constant dense<0.000000e+00> : vector<27x8xf32>
    %34 = tpu.matmul %31, %29, %cst_22 {dimension_numbers = #tpu.dot_dimension_numbers<[1], [1], [0], [0], [0, 0, 1, 0], [], []>} : vector<27x32xbf16>, vector<8x32xbf16>, vector<27x8xf32> -> vector<27x8xf32>
    %cst_23 = arith.constant dense<0xFF800000> : vector<27xf32>
    %35 = vector.multi_reduction <maximumf>, %34, %cst_23 [1] : vector<27x8xf32> to vector<27xf32>
    %36 = vector.shape_cast %35 : vector<27xf32> to vector<27x1xf32>
    %37 = vector.broadcast %36 : vector<27x1xf32> to vector<27x8xf32>
    %38 = arith.subf %34, %37 : vector<27x8xf32>
    %39 = math.exp %38 : vector<27x8xf32>
    %cst_24 = arith.constant dense<0.000000e+00> : vector<27xf32>
    %40 = vector.multi_reduction <add>, %39, %cst_24 [1] : vector<27x8xf32> to vector<27xf32>
    %41 = vector.shape_cast %40 : vector<27xf32> to vector<27x1xf32>
    %42 = tpu.reciprocal %41 {approx = true} : vector<27x1xf32> -> vector<27x1xf32>
    %43 = vector.broadcast %42 : vector<27x1xf32> to vector<27x8xf32>
    %44 = arith.mulf %39, %43 : vector<27x8xf32>
    %45 = arith.truncf %44 : vector<27x8xf32> to vector<27x8xbf16>
    %cst_25 = arith.constant dense<0.000000e+00> : vector<27x32xf32>
    %46 = tpu.matmul %45, %30, %cst_25 {dimension_numbers = #tpu.dot_dimension_numbers<[1], [0], [0], [1], [0, 0, 1, 1], [], []>} : vector<27x8xbf16>, vector<8x32xbf16>, vector<27x32xf32> -> vector<27x32xf32>
    %cst_26 = arith.constant dense<0.000000e+00> : vector<27xf32>
    %47 = vector.multi_reduction <add>, %46, %cst_26 [1] : vector<27x32xf32> to vector<27xf32>
    %48 = vector.shape_cast %47 : vector<27xf32> to vector<27x1xf32>
    %cst_27 = arith.constant 3.200000e+01 : f32
    %49 = vector.broadcast %cst_27 : f32 to vector<27x1xf32>
    %50 = arith.divf %48, %49 : vector<27x1xf32>
    %51 = vector.broadcast %50 : vector<27x1xf32> to vector<27x32xf32>
    %52 = arith.subf %46, %51 : vector<27x32xf32>
    %53 = arith.mulf %52, %52 : vector<27x32xf32>
    %cst_28 = arith.constant dense<0.000000e+00> : vector<27xf32>
    %54 = vector.multi_reduction <add>, %53, %cst_28 [1] : vector<27x32xf32> to vector<27xf32>
    %55 = vector.shape_cast %54 : vector<27xf32> to vector<27x1xf32>
    %cst_29 = arith.constant 3.200000e+01 : f32
    %56 = vector.broadcast %cst_29 : f32 to vector<27x1xf32>
    %57 = arith.divf %55, %56 : vector<27x1xf32>
    %cst_30 = arith.constant 9.99999974E-6 : f32
    %58 = vector.broadcast %cst_30 : f32 to vector<27x1xf32>
    %59 = arith.addf %57, %58 : vector<27x1xf32>
    %60 = math.rsqrt %59 : vector<27x1xf32>
    %61 = vector.broadcast %60 : vector<27x1xf32> to vector<27x32xf32>
    %62 = arith.mulf %52, %61 : vector<27x32xf32>
    %63 = vector.broadcast %32 : vector<1x32xf32> to vector<27x32xf32>
    %64 = arith.mulf %62, %63 : vector<27x32xf32>
    %65 = vector.broadcast %33 : vector<1x32xf32> to vector<27x32xf32>
    %66 = arith.addf %64, %65 : vector<27x32xf32>
    %c0_31 = arith.constant 0 : index
    %c0_32 = arith.constant 0 : index
    %c0_33 = arith.constant 0 : index
    %67 = vector.load %arg9[%c0_31, %c0_32, %c0_33] : memref<1x27x32xf32, #tpu.memory_space<vmem>>, vector<1x27x32xf32>
    %68 = vector.shape_cast %67 : vector<1x27x32xf32> to vector<27x32xf32>
    %69 = vector.shape_cast %66 : vector<27x32xf32> to vector<1x27x32xf32>
    tpu.vector_store %arg9[%c0_31, %c0_32, %c0_33], %69 {strides = array<i32>} : memref<1x27x32xf32, #tpu.memory_space<vmem>>, vector<1x27x32xf32>,
    %c0_34 = arith.constant 0 : index
    %c0_35 = arith.constant 0 : index
    %c0_36 = arith.constant 0 : index
    %70 = vector.load %arg10[%c0_34, %c0_35, %c0_36] : memref<1x27x8xf32, #tpu.memory_space<vmem>>, vector<1x27x8xf32>
    %71 = vector.shape_cast %70 : vector<1x27x8xf32> to vector<27x8xf32>
    %72 = vector.shape_cast %44 : vector<27x8xf32> to vector<1x27x8xf32>
    tpu.vector_store %arg10[%c0_34, %c0_35, %c0_36], %72 {strides = array<i32>} : memref<1x27x8xf32, #tpu.memory_space<vmem>>, vector<1x27x8xf32>,
    return
  }
  func.func @transform_0(%arg0: i32) -> (i32, i32, i32) {
    %c0_i32 = arith.constant 0 : i32
    %c0_i32_0 = arith.constant 0 : i32
    %c0_i32_1 = arith.constant 0 : i32
    return %arg0, %c0_i32, %c0_i32_0 : i32, i32, i32
  }
  func.func @transform_1(%arg0: i32) -> (i32, i32) {
    %c0_i32 = arith.constant 0 : i32
    %c0_i32_0 = arith.constant 0 : i32
    %c0_i32_1 = arith.constant 0 : i32
    return %c0_i32, %c0_i32_0 : i32, i32
  }
  func.func @transform_2(%arg0: i32) -> (i32, i32) {
    %c0_i32 = arith.constant 0 : i32
    %c0_i32_0 = arith.constant 0 : i32
    %c0_i32_1 = arith.constant 0 : i32
    return %c0_i32, %c0_i32_0 : i32, i32
  }
  func.func @transform_3(%arg0: i32) -> (i32, i32) {
    %c0_i32 = arith.constant 0 : i32
    %c0_i32_0 = arith.constant 0 : i32
    %c0_i32_1 = arith.constant 0 : i32
    return %c0_i32, %c0_i32_0 : i32, i32
  }
  func.func @transform_4(%arg0: i32) -> (i32, i32) {
    %c0_i32 = arith.constant 0 : i32
    %c0_i32_0 = arith.constant 0 : i32
    %c0_i32_1 = arith.constant 0 : i32
    return %c0_i32, %c0_i32_0 : i32, i32
  }
  func.func @transform_5(%arg0: i32) -> (i32, i32) {
    %c0_i32 = arith.constant 0 : i32
    %c0_i32_0 = arith.constant 0 : i32
    %c0_i32_1 = arith.constant 0 : i32
    return %c0_i32, %c0_i32_0 : i32, i32
  }
  func.func @transform_6(%arg0: i32) -> (i32, i32) {
    %c0_i32 = arith.constant 0 : i32
    %c0_i32_0 = arith.constant 0 : i32
    %c0_i32_1 = arith.constant 0 : i32
    return %c0_i32, %c0_i32_0 : i32, i32
  }
  func.func @transform_7(%arg0: i32) -> (i32, i32) {
    %c0_i32 = arith.constant 0 : i32
    %c0_i32_0 = arith.constant 0 : i32
    %c0_i32_1 = arith.constant 0 : i32
    return %c0_i32, %c0_i32_0 : i32, i32
  }
  func.func @transform_8(%arg0: i32) -> (i32, i32, i32) {
    %c0_i32 = arith.constant 0 : i32
    %c0_i32_0 = arith.constant 0 : i32
    %c0_i32_1 = arith.constant 0 : i32
    return %arg0, %c0_i32, %c0_i32_0 : i32, i32, i32
  }
  func.func @transform_9(%arg0: i32) -> (i32, i32, i32) {
    %c0_i32 = arith.constant 0 : i32
    %c0_i32_0 = arith.constant 0 : i32
    %c0_i32_1 = arith.constant 0 : i32
    return %arg0, %c0_i32, %c0_i32_0 : i32, i32, i32
  }
}

</mosaic_0001>

<llo_original>
// kernel: tpu_custom_call.1
$region0: #{tpu_custom_call.1}
  #allocation0 [shape = 'u32[]', space=smem, size = 0x4, offset = 0x4, fixed_abs, tag = 'smem constant byte address 0x4 - core index']
  #allocation1 [shape = 'u32[144,128]{1,0:T(1,128)}', space=vmem, size = 0x12000, scoped, tag = 'internal scratch']
  %s0 = inlined_call_operand.hbm [shape: f32[2,8,32], index: 0, kind: input, shape index: {}]
  %s1 = inlined_call_operand.vmem [shape: f32[1,32], index: 1, kind: input, shape index: {}]
  %s2 = inlined_call_operand.vmem [shape: f32[1,32], index: 2, kind: input, shape index: {}]
  %s3 = inlined_call_operand.hbm [shape: bf16[32,32], index: 3, kind: input, shape index: {}]
  %s4 = inlined_call_operand.hbm [shape: bf16[27,32], index: 4, kind: input, shape index: {}]
  %s5 = inlined_call_operand.hbm [shape: bf16[32,32], index: 5, kind: input, shape index: {}]
  %s6 = inlined_call_operand.vmem [shape: f32[1,32], index: 6, kind: input, shape index: {}]
  %s7 = inlined_call_operand.vmem [shape: f32[1,32], index: 7, kind: input, shape index: {}]
  %s8 = inlined_call_operand.vmem [shape: f32[2,27,32], index: 8, kind: output, shape index: {0}]
  %s9 = inlined_call_operand.vmem [shape: f32[2,27,8], index: 9, kind: output, shape index: {1}]
  %10 = xla_tuple %s8, %s9
  %s11 = sld [smem:[#allocation0]]
  $region89: #{tpu_custom_call.1} parent=0
    _
  %s13 = ssub.s32 1, %s11
  %s14 = scalar_select 0, %s13, %s11
  $region1: #{tpu_custom_call.1} parent=0
    #allocation2 [shape = 'u8[8192]{0}', space=vmem, size = 0x2000, scoped, tag = 'input window, operand 0']
    #allocation3 [shape = 's32[2]{0}', space=sflag, size = 0x8, scoped, tag = 'scoped memory for tpu_custom_call.1']
    #allocation4 [shape = 'u8[8192]{0}', space=vmem, size = 0x2000, scoped, tag = 'input window, operand 3, single buffered']
    #allocation5 [shape = 's32[1]{0}', space=sflag, size = 0x4, scoped, tag = 'scoped memory for tpu_custom_call.1']
    #allocation6 [shape = 'u8[8192]{0}', space=vmem, size = 0x2000, scoped, tag = 'input window, operand 4, single buffered']
    #allocation7 [shape = 'u8[8192]{0}', space=vmem, size = 0x2000, scoped, tag = 'input window, operand 5, single buffered']
    #allocation8 [shape = 's32[1]{0}', space=sflag, size = 0x4, scoped, tag = 'scoped memory for tpu_custom_call.1']
    %15 = vsyncpa [#allocation3], 0
    %s16 = scalar_lea.sflag [#allocation3], 1
    %17 = vsyncpa %s16, 0
    %18 = vsyncpa [#allocation5], 0
    %19 = vsyncpa [#allocation8], 0
    loop: start=0, step=1, limit=4
    $region2: #{tpu_custom_call.1} parent=1 // loop_pre_header
      _
    $region3: #{tpu_custom_call.1} parent=1 // loop_header
      %s21 = sphi 0, %s25
      %p22 = scmp.ge.s32.totalorder %s21, 4
      %s31 = sphi 0, %s33
      %s34 = sphi 0, %s31
      %s35 = sphi 0, %s34
      %s51 = sphi 0, %s35
      %s55 = sphi 0, %s55
      %s57 = sphi 0, %s55
      %s58 = sphi 0, %s57
      %s72 = sphi 0, %s58
      %s76 = sphi 0, %s76
      %s78 = sphi 0, %s76
      %s79 = sphi 0, %s78
      %s93 = sphi 0, %s79
      %s97 = sphi 0, %s97
      %s99 = sphi 0, %s97
      %s100 = sphi 0, %s99
      %s114 = sphi 0, %s100
      %s118 = sphi 0, %s118
      %s120 = sphi 0, %s118
      %s121 = sphi 0, %s120
      %s135 = sphi 0, %s121
      %s139 = sphi 0, %s139
      %s141 = sphi 0, %s139
      %s142 = sphi 0, %s141
      %s156 = sphi 0, %s142
      %s160 = sphi 0, %s160
      %s162 = sphi 0, %s160
      %s163 = sphi 0, %s162
      %s177 = sphi 0, %s163
      %s181 = sphi 0, %s181
      %s183 = sphi 0, %s181
      %s184 = sphi 0, %s183
      %s198 = sphi 0, %s184
      %s204 = sphi 0, %s206
      %s207 = sphi 0, %s204
      %s208 = sphi 0, %s207
      %s224 = sphi 0, %s208
      %s230 = sphi 0, %s232
      %s233 = sphi 0, %s230
      %s234 = sphi 0, %s233
      %s250 = sphi 0, %s234
    $region4: #{tpu_custom_call.1} parent=1 // loop_header_branch
      %24 = sbr.rel (%p22) target = $region8
    $region5: #{tpu_custom_call.1} parent=1 // loop_body
      %s26 = ssub.s32 %s21, 1
      %s27 = ssub.s32 %s21, 2
      %s28 = sadd.s32 %s21, 1
      %s29 = ssub.s32 %s21, %s28
      %p30 = scmp.eq.s32.totalorder %s29, 0
      %s32 = sadd.s32 %s31, 1
      %s33 = scalar_select %p30, %s31, %s32
      %p36 = pneg %p30
      %p37 = scmp.eq.s32.totalorder %s21, 1
      %p38 = por %p36, %p37
      %p39 = scmp.ne.s32.totalorder %s31, %s34
      %p40 = scmp.eq.s32.totalorder %s21, 0
      %p41 = por %p39, %p40
      %p42 = scmp.ne.s32.totalorder %s31, %s34
      %p43 = scmp.eq.s32.totalorder %s26, 1
      %p44 = por %p42, %p43
      %p45 = scmp.ne.s32.totalorder %s34, %s35
      %p46 = scmp.eq.s32.totalorder %s26, 0
      %p47 = por %p45, %p46
      %p48 = scmp.ne.s32.totalorder %s34, %s35
      %p49 = scmp.eq.s32.totalorder %s27, 1
      %p50 = por %p48, %p49
      %p52 = scmp.ne.s32.totalorder %s35, %s51
      %p53 = scmp.eq.s32.totalorder %s27, 0
      %p54 = por %p52, %p53
      %s56 = sadd.s32 %s55, 1
      %p59 = scmp.eq.s32.totalorder %s21, 1
      %p60 = scmp.ne.s32.totalorder %s55, %s57
      %p61 = scmp.eq.s32.totalorder %s21, 0
      %p62 = por %p60, %p61
      %p63 = scmp.ne.s32.totalorder %s55, %s57
      %p64 = scmp.eq.s32.totalorder %s26, 1
      %p65 = por %p63, %p64
      %p66 = scmp.ne.s32.totalorder %s57, %s58
      %p67 = scmp.eq.s32.totalorder %s26, 0
      %p68 = por %p66, %p67
      %p69 = scmp.ne.s32.totalorder %s57, %s58
      %p70 = scmp.eq.s32.totalorder %s27, 1
      %p71 = por %p69, %p70
      %p73 = scmp.ne.s32.totalorder %s58, %s72
      %p74 = scmp.eq.s32.totalorder %s27, 0
      %p75 = por %p73, %p74
      %s77 = sadd.s32 %s76, 1
      %p80 = scmp.eq.s32.totalorder %s21, 1
      %p81 = scmp.ne.s32.totalorder %s76, %s78
      %p82 = scmp.eq.s32.totalorder %s21, 0
      %p83 = por %p81, %p82
      %p84 = scmp.ne.s32.totalorder %s76, %s78
      %p85 = scmp.eq.s32.totalorder %s26, 1
      %p86 = por %p84, %p85
      %p87 = scmp.ne.s32.totalorder %s78, %s79
      %p88 = scmp.eq.s32.totalorder %s26, 0
      %p89 = por %p87, %p88
      %p90 = scmp.ne.s32.totalorder %s78, %s79
      %p91 = scmp.eq.s32.totalorder %s27, 1
      %p92 = por %p90, %p91
      %p94 = scmp.ne.s32.totalorder %s79, %s93
      %p95 = scmp.eq.s32.totalorder %s27, 0
      %p96 = por %p94, %p95
      %s98 = sadd.s32 %s97, 1
      %p101 = scmp.eq.s32.totalorder %s21, 1
      %p102 = scmp.ne.s32.totalorder %s97, %s99
      %p103 = scmp.eq.s32.totalorder %s21, 0
      %p104 = por %p102, %p103
      %p105 = scmp.ne.s32.totalorder %s97, %s99
      %p106 = scmp.eq.s32.totalorder %s26, 1
      %p107 = por %p105, %p106
      %p108 = scmp.ne.s32.totalorder %s99, %s100
      %p109 = scmp.eq.s32.totalorder %s26, 0
      %p110 = por %p108, %p109
      %p111 = scmp.ne.s32.totalorder %s99, %s100
      %p112 = scmp.eq.s32.totalorder %s27, 1
      %p113 = por %p111, %p112
      %p115 = scmp.ne.s32.totalorder %s100, %s114
      %p116 = scmp.eq.s32.totalorder %s27, 0
      %p117 = por %p115, %p116
      %s119 = sadd.s32 %s118, 1
      %p122 = scmp.eq.s32.totalorder %s21, 1
      %p123 = scmp.ne.s32.totalorder %s118, %s120
      %p124 = scmp.eq.s32.totalorder %s21, 0
      %p125 = por %p123, %p124
      %p126 = scmp.ne.s32.totalorder %s118, %s120
      %p127 = scmp.eq.s32.totalorder %s26, 1
      %p128 = por %p126, %p127
      %p129 = scmp.ne.s32.totalorder %s120, %s121
      %p130 = scmp.eq.s32.totalorder %s26, 0
      %p131 = por %p129, %p130
      %p132 = scmp.ne.s32.totalorder %s120, %s121
      %p133 = scmp.eq.s32.totalorder %s27, 1
      %p134 = por %p132, %p133
      %p136 = scmp.ne.s32.totalorder %s121, %s135
      %p137 = scmp.eq.s32.totalorder %s27, 0
      %p138 = por %p136, %p137
      %s140 = sadd.s32 %s139, 1
      %p143 = scmp.eq.s32.totalorder %s21, 1
      %p144 = scmp.ne.s32.totalorder %s139, %s141
      %p145 = scmp.eq.s32.totalorder %s21, 0
      %p146 = por %p144, %p145
      %p147 = scmp.ne.s32.totalorder %s139, %s141
      %p148 = scmp.eq.s32.totalorder %s26, 1
      %p149 = por %p147, %p148
      %p150 = scmp.ne.s32.totalorder %s141, %s142
      %p151 = scmp.eq.s32.totalorder %s26, 0
      %p152 = por %p150, %p151
      %p153 = scmp.ne.s32.totalorder %s141, %s142
      %p154 = scmp.eq.s32.totalorder %s27, 1
      %p155 = por %p153, %p154
      %p157 = scmp.ne.s32.totalorder %s142, %s156
      %p158 = scmp.eq.s32.totalorder %s27, 0
      %p159 = por %p157, %p158
      %s161 = sadd.s32 %s160, 1
      %p164 = scmp.eq.s32.totalorder %s21, 1
      %p165 = scmp.ne.s32.totalorder %s160, %s162
      %p166 = scmp.eq.s32.totalorder %s21, 0
      %p167 = por %p165, %p166
      %p168 = scmp.ne.s32.totalorder %s160, %s162
      %p169 = scmp.eq.s32.totalorder %s26, 1
      %p170 = por %p168, %p169
      %p171 = scmp.ne.s32.totalorder %s162, %s163
      %p172 = scmp.eq.s32.totalorder %s26, 0
      %p173 = por %p171, %p172
      %p174 = scmp.ne.s32.totalorder %s162, %s163
      %p175 = scmp.eq.s32.totalorder %s27, 1
      %p176 = por %p174, %p175
      %p178 = scmp.ne.s32.totalorder %s163, %s177
      %p179 = scmp.eq.s32.totalorder %s27, 0
      %p180 = por %p178, %p179
      %s182 = sadd.s32 %s181, 1
      %p185 = scmp.eq.s32.totalorder %s21, 1
      %p186 = scmp.ne.s32.totalorder %s181, %s183
      %p187 = scmp.eq.s32.totalorder %s21, 0
      %p188 = por %p186, %p187
      %p189 = scmp.ne.s32.totalorder %s181, %s183
      %p190 = scmp.eq.s32.totalorder %s26, 1
      %p191 = por %p189, %p190
      %p192 = scmp.ne.s32.totalorder %s183, %s184
      %p193 = scmp.eq.s32.totalorder %s26, 0
      %p194 = por %p192, %p193
      %p195 = scmp.ne.s32.totalorder %s183, %s184
      %p196 = scmp.eq.s32.totalorder %s27, 1
      %p197 = por %p195, %p196
      %p199 = scmp.ne.s32.totalorder %s184, %s198
      %p200 = scmp.eq.s32.totalorder %s27, 0
      %p201 = por %p199, %p200
      %s202 = ssub.s32 %s21, %s28
      %p203 = scmp.eq.s32.totalorder %s202, 0
      %s205 = sadd.s32 %s204, 1
      %s206 = scalar_select %p203, %s204, %s205
      %p209 = pneg %p203
      %p210 = scmp.eq.s32.totalorder %s21, 1
      %p211 = por %p209, %p210
      %p212 = scmp.ne.s32.totalorder %s204, %s207
      %p213 = scmp.eq.s32.totalorder %s21, 0
      %p214 = por %p212, %p213
      %p215 = scmp.ne.s32.totalorder %s204, %s207
      %p216 = scmp.eq.s32.totalorder %s26, 1
      %p217 = por %p215, %p216
      %p218 = scmp.ne.s32.totalorder %s207, %s208
      %p219 = scmp.eq.s32.totalorder %s26, 0
      %p220 = por %p218, %p219
      %p221 = scmp.ne.s32.totalorder %s207, %s208
      %p222 = scmp.eq.s32.totalorder %s27, 1
      %p223 = por %p221, %p222
      %p225 = scmp.ne.s32.totalorder %s208, %s224
      %p226 = scmp.eq.s32.totalorder %s27, 0
      %p227 = por %p225, %p226
      %s228 = ssub.s32 %s21, %s28
      %p229 = scmp.eq.s32.totalorder %s228, 0
      %s231 = sadd.s32 %s230, 1
      %s232 = scalar_select %p229, %s230, %s231
      %p235 = pneg %p229
      %p236 = scmp.eq.s32.totalorder %s21, 1
      %p237 = por %p235, %p236
      %p238 = scmp.ne.s32.totalorder %s230, %s233
      %p239 = scmp.eq.s32.totalorder %s21, 0
      %p240 = por %p238, %p239
      %p241 = scmp.ne.s32.totalorder %s230, %s233
      %p242 = scmp.eq.s32.totalorder %s26, 1
      %p243 = por %p241, %p242
      %p244 = scmp.ne.s32.totalorder %s233, %s234
      %p245 = scmp.eq.s32.totalorder %s26, 0
      %p246 = por %p244, %p245
      %p247 = scmp.ne.s32.totalorder %s233, %s234
      %p248 = scmp.eq.s32.totalorder %s27, 1
      %p249 = por %p247, %p248
      %p251 = scmp.ne.s32.totalorder %s234, %s250
      %p252 = scmp.eq.s32.totalorder %s27, 0
      %p253 = por %p251, %p252
      %p254 = scmp.le.s32.totalorder 1, %s21
      %p255 = scmp.lt.s32.totalorder %s21, 3
      %p256 = pnand %p254, %p255
      %p257 = pneg %p256
      // Predicated region
      $region9: #{tpu_custom_call.1} parent=5 // pred_check
        _
      $region10: #{tpu_custom_call.1} parent=5 // pred_check_branch
        %259 = sbr.rel (%p256) target = $region12
      $region11: #{tpu_custom_call.1} parent=5 // pred_region
        %s260 = ssub.s32 %s21, 1
        // Predicated region
        $region13: #{tpu_custom_call.1} parent=11 // pred_check
          %p261 = pneg %p68
        $region14: #{tpu_custom_call.1} parent=11 // pred_check_branch
          %263 = sbr.rel (%p261) target = $region16
        $region15: #{tpu_custom_call.1} parent=11 // pred_region
          _
        $region16: #{tpu_custom_call.1} parent=11 // pred_fallthru
          _
        // Predicated region
        $region17: #{tpu_custom_call.1} parent=11 // pred_check
          %p264 = pneg %p89
        $region18: #{tpu_custom_call.1} parent=11 // pred_check_branch
          %266 = sbr.rel (%p264) target = $region20
        $region19: #{tpu_custom_call.1} parent=11 // pred_region
          _
        $region20: #{tpu_custom_call.1} parent=11 // pred_fallthru
          _
        // Predicated region
        $region21: #{tpu_custom_call.1} parent=11 // pred_check
          %p267 = pneg %p110
        $region22: #{tpu_custom_call.1} parent=11 // pred_check_branch
          %269 = sbr.rel (%p267) target = $region24
        $region23: #{tpu_custom_call.1} parent=11 // pred_region
          %s271 = ssub.s32 256, 256
          %272 = vsyncadd [#allocation5], %s271
          %s273 = sshll.u32 [#allocation4], 4
          %s274 = int_to_ptr.vmem [resolvable:$true] %s273
          %279 = dma.hbm_to_vmem [thread:$0]  %s3, 256, %s274, [#allocation5], 64, 64, 4
        $region24: #{tpu_custom_call.1} parent=11 // pred_fallthru
          _
        // Predicated region
        $region25: #{tpu_custom_call.1} parent=11 // pred_check
          %p280 = pneg %p131
        $region26: #{tpu_custom_call.1} parent=11 // pred_check_branch
          %282 = sbr.rel (%p280) target = $region28
        $region27: #{tpu_custom_call.1} parent=11 // pred_region
          %s284 = ssub.s32 256, 256
          %285 = vsyncadd [#allocation5], %s284
          %s286 = sshll.u32 [#allocation6], 4
          %s287 = int_to_ptr.vmem [resolvable:$true] %s286
          %292 = dma.hbm_to_vmem [thread:$0]  %s4, 256, %s287, [#allocation5], 64, 64, 4
        $region28: #{tpu_custom_call.1} parent=11 // pred_fallthru
          _
        // Predicated region
        $region29: #{tpu_custom_call.1} parent=11 // pred_check
          %p293 = pneg %p152
        $region30: #{tpu_custom_call.1} parent=11 // pred_check_branch
          %295 = sbr.rel (%p293) target = $region32
        $region31: #{tpu_custom_call.1} parent=11 // pred_region
          %s297 = ssub.s32 256, 256
          %298 = vsyncadd [#allocation8], %s297
          %s299 = sshll.u32 [#allocation7], 4
          %s300 = int_to_ptr.vmem [resolvable:$true] %s299
          %305 = dma.hbm_to_vmem [thread:$0]  %s5, 256, %s300, [#allocation8], 64, 64, 4
        $region32: #{tpu_custom_call.1} parent=11 // pred_fallthru
          _
        // Predicated region
        $region33: #{tpu_custom_call.1} parent=11 // pred_check
          %p306 = pneg %p173
        $region34: #{tpu_custom_call.1} parent=11 // pred_check_branch
          %308 = sbr.rel (%p306) target = $region36
        $region35: #{tpu_custom_call.1} parent=11 // pred_region
          _
        $region36: #{tpu_custom_call.1} parent=11 // pred_fallthru
          _
        // Predicated region
        $region37: #{tpu_custom_call.1} parent=11 // pred_check
          %p309 = pneg %p194
        $region38: #{tpu_custom_call.1} parent=11 // pred_check_branch
          %311 = sbr.rel (%p309) target = $region40
        $region39: #{tpu_custom_call.1} parent=11 // pred_region
          _
        $region40: #{tpu_custom_call.1} parent=11 // pred_fallthru
          _
      $region12: #{tpu_custom_call.1} parent=5 // pred_fallthru
        _
      %p312 = scmp.lt.s32.totalorder %s21, 2
      // Predicated region
      $region41: #{tpu_custom_call.1} parent=5 // pred_check
        %p313 = pneg %p312
      $region42: #{tpu_custom_call.1} parent=5 // pred_check_branch
        %315 = sbr.rel (%p313) target = $region44
      $region43: #{tpu_custom_call.1} parent=5 // pred_region
        // Predicated region
        $region45: #{tpu_custom_call.1} parent=43 // pred_check
          %p316 = pneg %p41
        $region46: #{tpu_custom_call.1} parent=43 // pred_check_branch
          %318 = sbr.rel (%p316) target = $region48
        $region47: #{tpu_custom_call.1} parent=43 // pred_region
          %s319 = sand.u32 %s31, 1
          %s320 = scalar_lea.sflag [#allocation3], %s319
          %s321 = sand.u32 %s31, 1
          %s322 = smul.addr %s321, 8
          %s323 = scalar_lea.vmem [#allocation2], %s322
          %s325 = ssub.s32 128, 128
          %326 = vsyncadd %s320, %s325
          %s327 = smul.addr %s21, 128
          %s328 = scalar_lea.hbm %s0, %s327
          %s330 = sshll.u32 %s323, 4
          %s331 = int_to_ptr.vmem [resolvable:$true] %s330
          %333 = dma.hbm_to_vmem [thread:$0]  %s328, 128, %s331, %s320
        $region48: #{tpu_custom_call.1} parent=43 // pred_fallthru
          _
      $region44: #{tpu_custom_call.1} parent=5 // pred_fallthru
        _
      %p334 = scmp.le.s32.totalorder 1, %s21
      %p335 = scmp.lt.s32.totalorder %s21, 3
      %p336 = pnand %p334, %p335
      %p337 = pneg %p336
      // Predicated region
      $region49: #{tpu_custom_call.1} parent=5 // pred_check
        _
      $region50: #{tpu_custom_call.1} parent=5 // pred_check_branch
        %339 = sbr.rel (%p336) target = $region52
      $region51: #{tpu_custom_call.1} parent=5 // pred_region
        %s340 = ssub.s32 %s21, 1
        %s341 = sand.u32 %s34, 1
        %s342 = scalar_lea.sflag [#allocation3], %s341
        %s343 = sand.u32 %s34, 1
        %s344 = smul.addr %s343, 8
        %s345 = scalar_lea.vmem [#allocation2], %s344
        // Predicated region
        $region53: #{tpu_custom_call.1} parent=51 // pred_check
          %p346 = pneg %p47
        $region54: #{tpu_custom_call.1} parent=51 // pred_check_branch
          %348 = sbr.rel (%p346) target = $region56
        $region55: #{tpu_custom_call.1} parent=51 // pred_region
          %349 = dma.done %s342, 128
        $region56: #{tpu_custom_call.1} parent=51 // pred_fallthru
          _
        // Predicated region
        $region57: #{tpu_custom_call.1} parent=51 // pred_check
          %p350 = pneg %p110
        $region58: #{tpu_custom_call.1} parent=51 // pred_check_branch
          %352 = sbr.rel (%p350) target = $region60
        $region59: #{tpu_custom_call.1} parent=51 // pred_region
          %353 = dma.done [#allocation5], 256
        $region60: #{tpu_custom_call.1} parent=51 // pred_fallthru
          _
        // Predicated region
        $region61: #{tpu_custom_call.1} parent=51 // pred_check
          %p354 = pneg %p131
        $region62: #{tpu_custom_call.1} parent=51 // pred_check_branch
          %356 = sbr.rel (%p354) target = $region64
        $region63: #{tpu_custom_call.1} parent=51 // pred_region
          %357 = dma.done [#allocation5], 256
        $region64: #{tpu_custom_call.1} parent=51 // pred_fallthru
          _
        // Predicated region
        $region65: #{tpu_custom_call.1} parent=51 // pred_check
          %p358 = pneg %p152
        $region66: #{tpu_custom_call.1} parent=51 // pred_check_branch
          %360 = sbr.rel (%p358) target = $region68
        $region67: #{tpu_custom_call.1} parent=51 // pred_region
          %361 = dma.done [#allocation8], 256
        $region68: #{tpu_custom_call.1} parent=51 // pred_fallthru
          _
        %s362 = sand.u32 %s34, 1
        %s363 = scalar_lea.sflag [#allocation3], %s362
        %s364 = sand.u32 %s34, 1
        %s365 = smul.addr %s364, 8
        %s366 = scalar_lea.vmem [#allocation2], %s365
        %p367 = pneg %p47
        %p368 = pneg %p44
        %p369 = pneg %p68
        %p370 = pneg %p65
        %p371 = pneg %p89
        %p372 = pneg %p86
        %p373 = pneg %p110
        %p374 = pneg %p107
        %p375 = pneg %p131
        %p376 = pneg %p128
        %p377 = pneg %p152
        %p378 = pneg %p149
        %p379 = pneg %p173
        %p380 = pneg %p170
        %p381 = pneg %p194
        %p382 = pneg %p191
        %p383 = pneg %p220
        %p384 = pneg %p217
        %p385 = scmp.lt.s32.totalorder %s26, 1
        %s386 = scalar_select %p385, %s26, 1
        %s387 = smul.addr %s386, 4
        %s388 = smul.addr %s387, 8
        %s389 = scalar_lea.vmem %s8, %s388
        %p390 = pneg %p246
        %p391 = pneg %p243
        %p392 = scmp.lt.s32.totalorder %s26, 1
        %s393 = scalar_select %p392, %s26, 1
        %s394 = smul.addr %s393, 4
        %s395 = smul.addr %s394, 8
        %s396 = scalar_lea.vmem %s9, %s395
        %p397 = scmp.lt.s32.totalorder %s26, 1
        %s398 = scalar_select %p397, %s26, 1
        %s399 = smul.addr %s398, 4
        %s400 = smul.addr %s399, 8
        %s401 = scalar_lea.vmem %s8, %s400
        %p402 = scmp.lt.s32.totalorder %s26, 1
        %s403 = scalar_select %p402, %s26, 1
        %s404 = smul.addr %s403, 4
        %s405 = smul.addr %s404, 8
        %s406 = scalar_lea.vmem %s9, %s405
        %v408 = vld [vmem:[%s345] sm:$0xff]
        %v409 = vld [vmem:[%s1] sm:$0x1]
        %v410 = vld [vmem:[%s2] sm:$0x1]
        %vm411 = vcmask 261120
        %v412 = vsel %vm411, %v408, 0.0
        %413 = vadd.xlane.f32.xlu0 %v412
        %v414 = vpop.xlane.xlu0 %413
        %v415 = vrcp.pop 32.0
        %v416 = vmul.f32 %v414, %v415
        %v417 = vsub.f32 %v408, %v416
        %v418 = vmul.f32 %v417, %v417
        %v419 = vsel %vm411, %v418, 0.0
        %420 = vadd.xlane.f32.xlu0 %v419
        %v421 = vpop.xlane.xlu0 %420
        %v422 = vmul.f32 %v421, %v415
        %v423 = vadd.f32 %v422, 1e-05
        %v424 = vrsqrt.pop %v423
        %v425 = vmul.f32 %v417, %v424
        %v427 = vlaneseq
        %v428 = vshrl.u32 %v427, 7
        %v429 = vsub.s32 0, %v428
        %v430 = vrot.slane %v409, %v429
        %v432 = vmul.f32 %v425, %v430
        %v434 = vlaneseq
        %v435 = vshrl.u32 %v434, 7
        %v436 = vsub.s32 0, %v435
        %v437 = vrot.slane %v410, %v436
        %v439 = vadd.f32 %v432, %v437
        %v440 = vpack.c.bf16 %v439, %v439
        %v441 = vld [vmem:[#allocation4] sm:$0xf]
        %v442 = vld [vmem:[#allocation4 + $0x4] sm:$0xf]
        %v443 = vld [vmem:[#allocation4 + $0x8] sm:$0xf]
        %v444 = vld [vmem:[#allocation4 + $0xc] sm:$0xf]
        %v449 = vunpack.c.l.b16 %v441
        %v450 = vunpack.c.l.b16 %v442
        %v451 = vunpack.c.l.b16 %v443
        %v452 = vunpack.c.l.b16 %v444
        %v453 = vpack.c.b16 %v450, %v449
        %v454 = vpack.c.b16 %v452, %v451
        %v456 = vsel %vm411, %v440, 0
        %v459 = vsel %vm411, %v453, 0
        %v462 = vsel %vm411, %v454, 0
        %464 = vmatprep.subr.bf16.mxu0 0
        %465 = vmatpush1.bf16.xpose.msra.mxu0 0
        %466 = vmatprep.subr.bf16.mxu0 0
        %467 = vmatpush1.bf16.xpose.msra.mxu0 0
        %468 = vmatprep.subr.bf16.mxu0 0
        %469 = vmatpush1.bf16.xpose.msra.mxu0 0
        %470 = vmatprep.subr.bf16.mxu0 0
        %471 = vmatpush1.bf16.xpose.msra.mxu0 0
        %472 = vmatprep.subr.bf16.mxu0 0
        %473 = vmatpush1.bf16.xpose.msra.mxu0 0
        %474 = vmatprep.subr.bf16.mxu0 0
        %475 = vmatpush1.bf16.xpose.msra.mxu0 0
        %476 = vmatprep.subr.bf16.mxu0 0
        %477 = vmatpush1.bf16.xpose.msra.mxu0 %v462
        %478 = vmatprep.subr.bf16.mxu0 0
        %479 = vmatpush1.bf16.xpose.msra.mxu0 %v459
        %480 = vmatprep.subr.bf16.mxu0 0
        %481 = vmatpush2.bf16.xpose.msra.mxu0 0
        %482 = vmatprep.subr.bf16.mxu0 0
        %483 = vmatpush2.bf16.xpose.msra.mxu0 0
        %484 = vmatprep.subr.bf16.mxu0 0
        %485 = vmatpush2.bf16.xpose.msra.mxu0 0
        %486 = vmatprep.subr.bf16.mxu0 0
        %487 = vmatpush2.bf16.xpose.msra.mxu0 0
        %488 = vmatprep.subr.bf16.mxu0 0
        %489 = vmatpush2.bf16.xpose.msra.mxu0 0
        %490 = vmatprep.subr.bf16.mxu0 0
        %491 = vmatpush2.bf16.xpose.msra.mxu0 0
        %492 = vmatprep.subr.bf16.mxu0 0
        %493 = vmatpush2.bf16.xpose.msra.mxu0 0
        %494 = vmatprep.subr.bf16.mxu0 0
        %495 = vmatpush2.bf16.xpose.msra.mxu0 0
        %496 = vmatprep.mubr.bf16.mxu0 0
        %497 = vmatmul.mubr.bf16.gmra.mxu0 %v456
        %v498 = vpop.f32.mrf.mxu0
        %v499 = vadd.f32 0.0, %v498
        %v500 = vpop.f32.mrf.mxu0
        %v501 = vpop.f32.mrf.mxu0
        %v502 = vpop.f32.mrf.mxu0
        %503 = vdwg.mxu0
        %v504 = vld [vmem:[#allocation7] sm:$0xf]
        %v505 = vld [vmem:[#allocation7 + $0x4] sm:$0xf]
        %v506 = vld [vmem:[#allocation7 + $0x8] sm:$0xf]
        %v507 = vld [vmem:[#allocation7 + $0xc] sm:$0xf]
        %v512 = vunpack.c.l.b16 %v504
        %v513 = vunpack.c.l.b16 %v505
        %v514 = vunpack.c.l.b16 %v506
        %v515 = vunpack.c.l.b16 %v507
        %v516 = vpack.c.b16 %v513, %v512
        %v517 = vpack.c.b16 %v515, %v514
        %v519 = vsel %vm411, %v516, 0
        %v522 = vsel %vm411, %v517, 0
        %524 = vmatprep.subr.bf16.mxu0 0
        %525 = vmatpush1.bf16.xpose.msra.mxu0 0
        %526 = vmatprep.subr.bf16.mxu0 0
        %527 = vmatpush1.bf16.xpose.msra.mxu0 0
        %528 = vmatprep.subr.bf16.mxu0 0
        %529 = vmatpush1.bf16.xpose.msra.mxu0 0
        %530 = vmatprep.subr.bf16.mxu0 0
        %531 = vmatpush1.bf16.xpose.msra.mxu0 0
        %532 = vmatprep.subr.bf16.mxu0 0
        %533 = vmatpush1.bf16.xpose.msra.mxu0 0
        %534 = vmatprep.subr.bf16.mxu0 0
        %535 = vmatpush1.bf16.xpose.msra.mxu0 0
        %536 = vmatprep.subr.bf16.mxu0 0
        %537 = vmatpush1.bf16.xpose.msra.mxu0 %v522
        %538 = vmatprep.subr.bf16.mxu0 0
        %539 = vmatpush1.bf16.xpose.msra.mxu0 %v519
        %540 = vmatprep.subr.bf16.mxu0 0
        %541 = vmatpush2.bf16.xpose.msra.mxu0 0
        %542 = vmatprep.subr.bf16.mxu0 0
        %543 = vmatpush2.bf16.xpose.msra.mxu0 0
        %544 = vmatprep.subr.bf16.mxu0 0
        %545 = vmatpush2.bf16.xpose.msra.mxu0 0
        %546 = vmatprep.subr.bf16.mxu0 0
        %547 = vmatpush2.bf16.xpose.msra.mxu0 0
        %548 = vmatprep.subr.bf16.mxu0 0
        %549 = vmatpush2.bf16.xpose.msra.mxu0 0
        %550 = vmatprep.subr.bf16.mxu0 0
        %551 = vmatpush2.bf16.xpose.msra.mxu0 0
        %552 = vmatprep.subr.bf16.mxu0 0
        %553 = vmatpush2.bf16.xpose.msra.mxu0 0
        %554 = vmatprep.subr.bf16.mxu0 0
        %555 = vmatpush2.bf16.xpose.msra.mxu0 0
        %556 = vmatprep.mubr.bf16.mxu0 0
        %557 = vmatmul.mubr.bf16.gmra.mxu0 %v456
        %v558 = vpop.f32.mrf.mxu0
        %v559 = vadd.f32 0.0, %v558
        %v560 = vpop.f32.mrf.mxu0
        %v561 = vpop.f32.mrf.mxu0
        %v562 = vpop.f32.mrf.mxu0
        %563 = vdwg.mxu0
        %v564 = vpack.c.bf16 %v499, %v499
        %v565 = vpack.c.bf16 %v559, %v559
        %v566 = vld [vmem:[#allocation6] sm:$0xf]
        %v567 = vld [vmem:[#allocation6 + $0x4] sm:$0xf]
        %v568 = vld [vmem:[#allocation6 + $0x8] sm:$0xf]
        %v569 = vld [vmem:[#allocation6 + $0xc] sm:$0x3]
        %v570 = vld [vmem:[%s6] sm:$0x1]
        %v571 = vld [vmem:[%s7] sm:$0x1]
        %v576 = vunpack.c.l.b16 %v566
        %v577 = vunpack.c.l.b16 %v567
        %v578 = vunpack.c.l.b16 %v568
        %v579 = vunpack.c.l.b16 %v569
        %v580 = vpack.c.b16 %v577, %v576
        %v581 = vpack.c.b16 %v579, %v578
        %v583 = vsel %vm411, %v580, 0
        %v586 = vsel %vm411, %v581, 0
        %v589 = vsel %vm411, %v564, 0
        %591 = vmatprep.subr.bf16.mxu0 0
        %592 = vmatpush1.bf16.xpose.msra.mxu0 0
        %593 = vmatprep.subr.bf16.mxu0 0
        %594 = vmatpush1.bf16.xpose.msra.mxu0 0
        %595 = vmatprep.subr.bf16.mxu0 0
        %596 = vmatpush1.bf16.xpose.msra.mxu0 0
        %597 = vmatprep.subr.bf16.mxu0 0
        %598 = vmatpush1.bf16.xpose.msra.mxu0 0
        %599 = vmatprep.subr.bf16.mxu0 0
        %600 = vmatpush1.bf16.xpose.msra.mxu0 0
        %601 = vmatprep.subr.bf16.mxu0 0
        %602 = vmatpush1.bf16.xpose.msra.mxu0 0
        %603 = vmatprep.subr.bf16.mxu0 0
        %604 = vmatpush1.bf16.xpose.msra.mxu0 0
        %605 = vmatprep.subr.bf16.mxu0 0
        %606 = vmatpush1.bf16.xpose.msra.mxu0 %v589
        %607 = vmatprep.subr.bf16.mxu0 0
        %608 = vmatpush2.bf16.xpose.msra.mxu0 0
        %609 = vmatprep.subr.bf16.mxu0 0
        %610 = vmatpush2.bf16.xpose.msra.mxu0 0
        %611 = vmatprep.subr.bf16.mxu0 0
        %612 = vmatpush2.bf16.xpose.msra.mxu0 0
        %613 = vmatprep.subr.bf16.mxu0 0
        %614 = vmatpush2.bf16.xpose.msra.mxu0 0
        %615 = vmatprep.subr.bf16.mxu0 0
        %616 = vmatpush2.bf16.xpose.msra.mxu0 0
        %617 = vmatprep.subr.bf16.mxu0 0
        %618 = vmatpush2.bf16.xpose.msra.mxu0 0
        %619 = vmatprep.subr.bf16.mxu0 0
        %620 = vmatpush2.bf16.xpose.msra.mxu0 0
        %621 = vmatprep.subr.bf16.mxu0 0
        %622 = vmatpush2.bf16.xpose.msra.mxu0 0
        %623 = vmatprep.mubr.bf16.mxu0 0
        %624 = vmatmul.mubr.bf16.gmra.mxu0 %v583
        %v625 = vpop.f32.mrf.mxu0
        %v626 = vadd.f32 0.0, %v625
        %v627 = vpop.f32.mrf.mxu0
        %v628 = vpop.f32.mrf.mxu0
        %v629 = vadd.f32 0.0, %v628
        %v630 = vpop.f32.mrf.mxu0
        %631 = vmatprep.mubr.bf16.mxu0 0
        %632 = vmatmul.mubr.bf16.gmra.mxu0 %v586
        %v633 = vpop.f32.mrf.mxu0
        %v634 = vadd.f32 0.0, %v633
        %v635 = vpop.f32.mrf.mxu0
        %v636 = vpop.f32.mrf.mxu0
        %v637 = vadd.f32 0.0, %v636
        %v638 = vpop.f32.mrf.mxu0
        %639 = vdwg.mxu0
        %vm640 = vcmask 64512
        %v641 = vsel %vm640, %v626, -inf
        %642 = vmax.xlane.f32.xlu0 %v641
        %v643 = vpop.xlane.xlu0 %642
        %v644 = vsel %vm640, %v629, -inf
        %645 = vmax.xlane.f32.xlu0 %v644
        %v646 = vpop.xlane.xlu0 %645
        %v647 = vsel %vm640, %v634, -inf
        %648 = vmax.xlane.f32.xlu0 %v647
        %v649 = vpop.xlane.xlu0 %648
        %vm650 = vcmask 59392
        %v651 = vsel %vm650, %v637, -inf
        %652 = vmax.xlane.f32.xlu0 %v651
        %v653 = vpop.xlane.xlu0 %652
        %v654 = vsub.f32 %v626, %v643
        %v655 = vsub.f32 %v629, %v646
        %v656 = vsub.f32 %v634, %v649
        %v657 = vsub.f32 %v637, %v653
        %v658 = vmul.f32 %v654, 1.442695
        %v659 = vpow.pop %v658
        %v660 = vmul.f32 %v655, 1.442695
        %v661 = vpow.pop %v660
        %v662 = vmul.f32 %v656, 1.442695
        %v663 = vpow.pop %v662
        %v664 = vmul.f32 %v657, 1.442695
        %v665 = vpow.pop %v664
        %v666 = vsel %vm640, %v659, 0.0
        %667 = vadd.xlane.f32.xlu0 %v666
        %v668 = vpop.xlane.xlu0 %667
        %v669 = vsel %vm640, %v661, 0.0
        %670 = vadd.xlane.f32.xlu0 %v669
        %v671 = vpop.xlane.xlu0 %670
        %v672 = vsel %vm640, %v663, 0.0
        %673 = vadd.xlane.f32.xlu0 %v672
        %v674 = vpop.xlane.xlu0 %673
        %v675 = vsel %vm650, %v665, 0.0
        %676 = vadd.xlane.f32.xlu0 %v675
        %v677 = vpop.xlane.xlu0 %676
        %v678 = vrcp.pop %v668
        %v679 = vrcp.pop %v671
        %v680 = vrcp.pop %v674
        %v681 = vrcp.pop %v677
        %v682 = vmul.f32 %v659, %v678
        %v683 = vmul.f32 %v661, %v679
        %v684 = vmul.f32 %v663, %v680
        %v685 = vmul.f32 %v665, %v681
        %v686 = vpack.c.bf16 %v683, %v682
        %v687 = vpack.c.bf16 %v685, %v684
        %v689 = vsel %vm640, %v686, 0
        %v692 = vsel %vm640, %v687, 0
        %vm694 = vcmask 1043456
        %v696 = vsel %vm694, %v565, 0
        %698 = vmatprep.subr.bf16.mxu0 0
        %699 = vmatpush1.bf16.msra.mxu0 0
        %700 = vmatprep.subr.bf16.mxu0 0
        %701 = vmatpush1.bf16.msra.mxu0 0
        %702 = vmatprep.subr.bf16.mxu0 0
        %703 = vmatpush1.bf16.msra.mxu0 0
        %704 = vmatprep.subr.bf16.mxu0 0
        %705 = vmatpush1.bf16.msra.mxu0 0
        %706 = vmatprep.subr.bf16.mxu0 0
        %707 = vmatpush1.bf16.msra.mxu0 0
        %708 = vmatprep.subr.bf16.mxu0 0
        %709 = vmatpush1.bf16.msra.mxu0 0
        %710 = vmatprep.subr.bf16.mxu0 0
        %711 = vmatpush1.bf16.msra.mxu0 0
        %712 = vmatprep.subr.bf16.mxu0 0
        %713 = vmatpush1.bf16.msra.mxu0 %v696
        %714 = vmatprep.subr.bf16.mxu0 0
        %715 = vmatpush2.bf16.msra.mxu0 0
        %716 = vmatprep.subr.bf16.mxu0 0
        %717 = vmatpush2.bf16.msra.mxu0 0
        %718 = vmatprep.subr.bf16.mxu0 0
        %719 = vmatpush2.bf16.msra.mxu0 0
        %720 = vmatprep.subr.bf16.mxu0 0
        %721 = vmatpush2.bf16.msra.mxu0 0
        %722 = vmatprep.subr.bf16.mxu0 0
        %723 = vmatpush2.bf16.msra.mxu0 0
        %724 = vmatprep.subr.bf16.mxu0 0
        %725 = vmatpush2.bf16.msra.mxu0 0
        %726 = vmatprep.subr.bf16.mxu0 0
        %727 = vmatpush2.bf16.msra.mxu0 0
        %728 = vmatprep.subr.bf16.mxu0 0
        %729 = vmatpush2.bf16.msra.mxu0 0
        %730 = vmatprep.mubr.bf16.mxu0 0
        %731 = vmatmul.mubr.bf16.gmra.mxu0 %v689
        %v732 = vpop.f32.mrf.mxu0
        %v733 = vadd.f32 0.0, %v732
        %v734 = vpop.f32.mrf.mxu0
        %v735 = vpop.f32.mrf.mxu0
        %v736 = vadd.f32 0.0, %v735
        %v737 = vpop.f32.mrf.mxu0
        %738 = vmatprep.mubr.bf16.mxu0 0
        %739 = vmatmul.mubr.bf16.gmra.mxu0 %v692
        %v740 = vpop.f32.mrf.mxu0
        %v741 = vadd.f32 0.0, %v740
        %v742 = vpop.f32.mrf.mxu0
        %v743 = vpop.f32.mrf.mxu0
        %v744 = vadd.f32 0.0, %v743
        %v745 = vpop.f32.mrf.mxu0
        %746 = vdwg.mxu0
        %v747 = vsel %vm411, %v733, 0.0
        %748 = vadd.xlane.f32.xlu0 %v747
        %v749 = vpop.xlane.xlu0 %748
        %v750 = vsel %vm411, %v736, 0.0
        %751 = vadd.xlane.f32.xlu0 %v750
        %v752 = vpop.xlane.xlu0 %751
        %v753 = vsel %vm411, %v741, 0.0
        %754 = vadd.xlane.f32.xlu0 %v753
        %v755 = vpop.xlane.xlu0 %754
        %vm756 = vcmask 256000
        %v757 = vsel %vm756, %v744, 0.0
        %758 = vadd.xlane.f32.xlu0 %v757
        %v759 = vpop.xlane.xlu0 %758
        %v760 = vmul.f32 %v749, %v415
        %v761 = vmul.f32 %v752, %v415
        %v762 = vmul.f32 %v755, %v415
        %v763 = vmul.f32 %v759, %v415
        %v764 = vsub.f32 %v733, %v760
        %v765 = vsub.f32 %v736, %v761
        %v766 = vsub.f32 %v741, %v762
        %v767 = vsub.f32 %v744, %v763
        %v768 = vmul.f32 %v764, %v764
        %v769 = vmul.f32 %v765, %v765
        %v770 = vmul.f32 %v766, %v766
        %v771 = vmul.f32 %v767, %v767
        %v772 = vsel %vm411, %v768, 0.0
        %773 = vadd.xlane.f32.xlu0 %v772
        %v774 = vpop.xlane.xlu0 %773
        %v775 = vsel %vm411, %v769, 0.0
        %776 = vadd.xlane.f32.xlu0 %v775
        %v777 = vpop.xlane.xlu0 %776
        %v778 = vsel %vm411, %v770, 0.0
        %779 = vadd.xlane.f32.xlu0 %v778
        %v780 = vpop.xlane.xlu0 %779
        %v781 = vsel %vm756, %v771, 0.0
        %782 = vadd.xlane.f32.xlu0 %v781
        %v783 = vpop.xlane.xlu0 %782
        %v784 = vmul.f32 %v774, %v415
        %v785 = vmul.f32 %v777, %v415
        %v786 = vmul.f32 %v780, %v415
        %v787 = vmul.f32 %v783, %v415
        %v788 = vadd.f32 %v784, 1e-05
        %v789 = vadd.f32 %v785, 1e-05
        %v790 = vadd.f32 %v786, 1e-05
        %v791 = vadd.f32 %v787, 1e-05
        %v792 = vrsqrt.pop %v788
        %v793 = vrsqrt.pop %v789
        %v794 = vrsqrt.pop %v790
        %v795 = vrsqrt.pop %v791
        %v796 = vmul.f32 %v764, %v792
        %v797 = vmul.f32 %v765, %v793
        %v798 = vmul.f32 %v766, %v794
        %v799 = vmul.f32 %v767, %v795
        %v801 = vlaneseq
        %v802 = vshrl.u32 %v801, 7
        %v803 = vsub.s32 0, %v802
        %v804 = vrot.slane %v570, %v803
        %v806 = vmul.f32 %v796, %v804
        %v807 = vmul.f32 %v797, %v804
        %v808 = vmul.f32 %v798, %v804
        %v809 = vmul.f32 %v799, %v804
        %v811 = vlaneseq
        %v812 = vshrl.u32 %v811, 7
        %v813 = vsub.s32 0, %v812
        %v814 = vrot.slane %v571, %v813
        %v816 = vadd.f32 %v806, %v814
        %v817 = vadd.f32 %v807, %v814
        %v818 = vadd.f32 %v808, %v814
        %v819 = vadd.f32 %v809, %v814
        %820 = vst.msk [vmem:[%s401] sm:$0xff] %vm411, %v816
        %821 = vst.msk [vmem:[%s401 + $0x8] sm:$0xff] %vm411, %v817
        %822 = vst.msk [vmem:[%s401 + $0x10] sm:$0xff] %vm411, %v818
        %823 = vst.msk [vmem:[%s401 + $0x18] sm:$0x7] %vm756, %v819
        %824 = vst.msk [vmem:[%s406] sm:$0xff] %vm640, %v682
        %825 = vst.msk [vmem:[%s406 + $0x8] sm:$0xff] %vm640, %v683
        %826 = vst.msk [vmem:[%s406 + $0x10] sm:$0xff] %vm640, %v684
        %827 = vst.msk [vmem:[%s406 + $0x18] sm:$0x7] %vm650, %v685
        %p828 = scmp.lt.s32.totalorder %s26, 1
        %s829 = scalar_select %p828, %s26, 1
        %s830 = smul.addr %s829, 4
        %s831 = smul.addr %s830, 8
        %s832 = scalar_lea.vmem %s8, %s831
        %p833 = scmp.lt.s32.totalorder %s26, 1
        %s834 = scalar_select %p833, %s26, 1
        %s835 = smul.addr %s834, 4
        %s836 = smul.addr %s835, 8
        %s837 = scalar_lea.vmem %s9, %s836
        // Predicated region
        $region69: #{tpu_custom_call.1} parent=51 // pred_check
          %p838 = pneg %p217
        $region70: #{tpu_custom_call.1} parent=51 // pred_check_branch
          %840 = sbr.rel (%p838) target = $region72
        $region71: #{tpu_custom_call.1} parent=51 // pred_region
          _
        $region72: #{tpu_custom_call.1} parent=51 // pred_fallthru
          _
        // Predicated region
        $region73: #{tpu_custom_call.1} parent=51 // pred_check
          %p841 = pneg %p243
        $region74: #{tpu_custom_call.1} parent=51 // pred_check_branch
          %843 = sbr.rel (%p841) target = $region76
        $region75: #{tpu_custom_call.1} parent=51 // pred_region
          _
        $region76: #{tpu_custom_call.1} parent=51 // pred_fallthru
          _
      $region52: #{tpu_custom_call.1} parent=5 // pred_fallthru
        _
      %p844 = scmp.le.s32.totalorder 2, %s21
      // Predicated region
      $region77: #{tpu_custom_call.1} parent=5 // pred_check
        %p845 = pneg %p844
      $region78: #{tpu_custom_call.1} parent=5 // pred_check_branch
        %847 = sbr.rel (%p845) target = $region80
      $region79: #{tpu_custom_call.1} parent=5 // pred_region
        %s848 = ssub.s32 %s21, 2
        // Predicated region
        $region81: #{tpu_custom_call.1} parent=79 // pred_check
          %p849 = pneg %p223
        $region82: #{tpu_custom_call.1} parent=79 // pred_check_branch
          %851 = sbr.rel (%p849) target = $region84
        $region83: #{tpu_custom_call.1} parent=79 // pred_region
          %p852 = scmp.lt.s32.totalorder %s27, 1
          %s853 = scalar_select %p852, %s27, 1
          %s854 = smul.addr %s853, 4
          %s855 = smul.addr %s854, 8
          %s856 = scalar_lea.vmem %s8, %s855
        $region84: #{tpu_custom_call.1} parent=79 // pred_fallthru
          _
        // Predicated region
        $region85: #{tpu_custom_call.1} parent=79 // pred_check
          %p857 = pneg %p249
        $region86: #{tpu_custom_call.1} parent=79 // pred_check_branch
          %859 = sbr.rel (%p857) target = $region88
        $region87: #{tpu_custom_call.1} parent=79 // pred_region
          %p860 = scmp.lt.s32.totalorder %s27, 1
          %s861 = scalar_select %p860, %s27, 1
          %s862 = smul.addr %s861, 4
          %s863 = smul.addr %s862, 8
          %s864 = scalar_lea.vmem %s9, %s863
        $region88: #{tpu_custom_call.1} parent=79 // pred_fallthru
          _
      $region80: #{tpu_custom_call.1} parent=5 // pred_fallthru
        _
    $region6: #{tpu_custom_call.1} parent=1 // loop_footer
      %s25 = sadd.s32 1, %s21
    $region7: #{tpu_custom_call.1} parent=1 // loop_footer_branch
      %20 = sbr.rel target = $region3
    $region8: #{tpu_custom_call.1} parent=1 // loop_exit
      _
    %865 = vsyncpa [#allocation3], 1
    %s866 = scalar_lea.sflag [#allocation3], 1
    %867 = vsyncpa %s866, 1
    %868 = vsyncpa [#allocation5], 1
    %869 = vsyncpa [#allocation8], 1

</llo_original>
